<compile_context>
chip_gen: v7x
topology: tpu7x:2x2x1
jax: 0.10.0
libtpu: 0.0.40
codegen_flags: <defaults>
</compile_context>

<pallas_src>
import functools

import jax
import jax.numpy as jnp
from jax import lax
from jax.experimental import pallas as pl
from jax.experimental.pallas import tpu as pltpu


_MIB = 1024 * 1024
_TILE_TARGET_BYTES = 4 * _MIB      # per-block VMEM target for the tiled path


# ---------------- helpers ----------------

def _neutral_for(dtype):
    """Min-neutral fill value as a plain Python scalar."""
    dtype = jnp.dtype(dtype)
    if jnp.issubdtype(dtype, jnp.floating):
        return float("inf")
    return int(jnp.iinfo(dtype).max)


def _smem_dtype_for(dtype):
    """Exact scalar carrier for the global min (no f32 round-trip for ints)."""
    dtype = jnp.dtype(dtype)
    return jnp.float32 if jnp.issubdtype(dtype, jnp.floating) else jnp.int32


def _vmem_capacity_bytes():
    """Per-core VMEM capacity; conservative 64 MiB fallback (v7x-safe)."""
    try:
        cap = int(getattr(pltpu.get_tpu_info(), "vmem_capacity_bytes", 0))
        if cap > 0:
            return cap
    except Exception:
        pass
    return 64 * _MIB


def _round_up(v, m):
    return ((v + m - 1) // m) * m


def _slab_view(x):
    """Return (2D slab, needs_trailing_slice). Zero-copy whenever possible."""
    n = x.size
    itemsize = jnp.dtype(x.dtype).itemsize
    # Lane-dense flat view (free bitcast) when the total size is 128-divisible.
    for lane in (512, 256, 128):
        if n % lane == 0:
            return x.reshape(n // lane, lane), False
    # Ragged total size: collapse leading dims onto the last dim (also free),
    # provided the lane width is sane and an 8-row block still fits the tile
    # budget (guards pathological huge last dims).
    if x.ndim >= 2 and x.shape[-1] >= 128:
        c = x.shape[-1]
        if 8 * _round_up(c, 128) * itemsize <= _TILE_TARGET_BYTES:
            return x.reshape(-1, c), False
    # Degenerate fallback (e.g. ragged 1-D): single min-neutral pad to a
    # 128-multiple.  This is the only path that pays an extra copy.
    lane = 128
    pad = (-n) % lane
    xf = x.reshape(-1)
    if pad:
        xf = jnp.pad(xf, (0, pad), constant_values=_neutral_for(x.dtype))
    return xf.reshape(-1, lane), pad > 0


# ---------------- kernels ----------------

def _fused_add_min_kernel(x_ref, o_ref):
    """Whole slab resident in VMEM: min + add in one pass (2N HBM traffic)."""
    x = x_ref[...]
    o_ref[...] = x + jnp.min(x)


def _min_pass_kernel(x_ref, min_ref, acc_ref, *, total_rows, block_rows,
                     need_mask, neutral, smem_dtype):
    """Pass A: fold each row tile into a (1, C) vector-min accumulator."""
    i = pl.program_id(0)

    @pl.when(i == 0)
    def _():
        acc_ref[...] = jnp.full(acc_ref.shape, neutral, acc_ref.dtype)

    x = x_ref[...]
    if need_mask:
        # Only the last (partial) block has out-of-bounds rows; masking every
        # step is cheap VPU work hidden under the tile DMA.
        rid = lax.broadcasted_iota(jnp.int32, x.shape, 0) + i * block_rows
        x = jnp.where(rid < total_rows, x, jnp.asarray(neutral, x.dtype))

    acc_ref[...] = jnp.minimum(acc_ref[...], jnp.min(x, axis=0, keepdims=True))

    @pl.when(i == pl.num_programs(0) - 1)
    def _():
        # Single cross-lane reduce + SMEM scalar write, once per pass.
        min_ref[0, 0] = jnp.min(acc_ref[...]).astype(smem_dtype)


def _add_scalar_kernel(min_ref, x_ref, o_ref):
    """Pass B: streaming elementwise add of the SMEM scalar."""
    o_ref[...] = x_ref[...] + min_ref[0, 0].astype(x_ref.dtype)


# ---------------- wrapper ----------------

def add_min_value(x, *, fused_vmem_fraction=0.75,
                  tile_bytes=_TILE_TARGET_BYTES, force_tiled=False):
    """Pallas equivalent of AddMinValue.forward: x + min(x)."""
    orig_shape = x.shape
    dtype = x.dtype
    n = x.size
    if n == 0:
        return x
    itemsize = jnp.dtype(dtype).itemsize

    slab, needs_slice = _slab_view(x)
    rows, cols = slab.shape
    cols_pad = _round_up(cols, 128)
    rows_pad8 = _round_up(rows, 8)
    slab_vmem = rows_pad8 * cols_pad * itemsize          # VMEM footprint of slab
    nbytes = n * itemsize

    cap = _vmem_capacity_bytes()
    usable = int(cap * fused_vmem_fraction)              # ~48 MiB v7x, ~96 MiB v5e/v6e
    fused = (not force_tiled) and (2 * slab_vmem + 2 * _MIB <= usable)

    if fused:
        vlim = min(cap, max(2 * slab_vmem + 4 * _MIB, 32 * _MIB))
        out2d = pl.pallas_call(
            _fused_add_min_kernel,
            out_shape=jax.ShapeDtypeStruct((rows, cols), dtype),
            compiler_params=pltpu.CompilerParams(vmem_limit_bytes=vlim),
            cost_estimate=pl.CostEstimate(
                flops=2 * n, transcendentals=0, bytes_accessed=2 * nbytes),
        )(slab)
    else:
        # ---- tiled two-pass path ----
        block_rows = max(8, (tile_bytes // (cols_pad * itemsize)) // 8 * 8)
        block_rows = min(block_rows, rows_pad8)
        grid_rows = pl.cdiv(rows, block_rows)
        need_mask = (rows % block_rows) != 0
        neutral = _neutral_for(dtype)
        smem_dtype = _smem_dtype_for(dtype)
        block_bytes = block_rows * cols_pad * itemsize
        # Pass B double-buffers input + output tiles (4 buffers); leave margin.
        vlim = min(int(cap * 0.9), max(4 * block_bytes + 16 * _MIB, 32 * _MIB))

        min_kernel = functools.partial(
            _min_pass_kernel, total_rows=rows, block_rows=block_rows,
            need_mask=need_mask, neutral=neutral, smem_dtype=smem_dtype)

        # Pass A: streaming global-min reduction -> (1,1) scalar in SMEM.
        min_val = pl.pallas_call(
            min_kernel,
            out_shape=jax.ShapeDtypeStruct((1, 1), smem_dtype),
            grid=(grid_rows,),
            in_specs=[pl.BlockSpec((block_rows, cols), lambda i: (i, 0))],
            out_specs=pl.BlockSpec(memory_space=pltpu.MemorySpace.SMEM),
            scratch_shapes=[pltpu.VMEM((1, cols), dtype)],
            compiler_params=pltpu.CompilerParams(
                dimension_semantics=("arbitrary",), vmem_limit_bytes=vlim),
            cost_estimate=pl.CostEstimate(
                flops=n, transcendentals=0,
                bytes_accessed=rows * cols * itemsize + 4),
        )(slab)

        # Pass B: streaming elementwise add (parallel across tiles / cores).
        out2d = pl.pallas_call(
            _add_scalar_kernel,
            out_shape=jax.ShapeDtypeStruct((rows, cols), dtype),
            grid=(grid_rows,),
            in_specs=[pl.BlockSpec(memory_space=pltpu.MemorySpace.SMEM),
                      pl.BlockSpec((block_rows, cols), lambda i: (i, 0))],
            out_specs=pl.BlockSpec((block_rows, cols), lambda i: (i, 0)),
            compiler_params=pltpu.CompilerParams(
                dimension_semantics=("parallel",), vmem_limit_bytes=vlim),
            cost_estimate=pl.CostEstimate(
                flops=n, transcendentals=0,
                bytes_accessed=2 * rows * cols * itemsize + 4),
        )(min_val, slab)

    if needs_slice:
        return out2d.reshape(-1)[:n].reshape(orig_shape)
    return out2d.reshape(orig_shape)


if __name__ == "__main__":
    k0, k1, k2 = jax.random.split(jax.random.PRNGKey(0), 3)

    # 1) Small NCHW activation (module's typical use): fused lane-dense path.
    x = jax.random.normal(k0, (2, 4, 16, 16), dtype=jnp.float32)
    out = jax.block_until_ready(add_min_value(x))
    ref = x + jnp.min(x)
    assert out.shape == x.shape
    assert jnp.allclose(out, ref, atol=1e-6, rtol=1e-6)

    # 2) Ragged tensor (n not a multiple of 128): zero-copy last-dim slab.
    #    a) fused path, b) forced tiled two-pass path (exercises row masking).
    x_rag = jax.random.normal(k1, (2, 3, 513, 515), dtype=jnp.float32)
    ref_rag = x_rag + jnp.min(x_rag)
    out_rag_fused = jax.block_until_ready(add_min_value(x_rag))
    out_rag_tiled = jax.block_until_ready(add_min_value(x_rag, force_tiled=True))
    assert out_rag_fused.shape == x_rag.shape
    assert jnp.allclose(out_rag_fused, ref_rag, atol=1e-6, rtol=1e-6)
    assert jnp.allclose(out_rag_tiled, ref_rag, atol=1e-6, rtol=1e-6)

    # 3) Integer input with |min| > 2^24: must stay exact (no f32 round-trip).
    x_int = jax.random.randint(k2, (4, 8, 128), -(2 ** 30), 2 ** 30,
                               dtype=jnp.int32)
    ref_int = x_int + jnp.min(x_int)
    out_int_fused = jax.block_until_ready(add_min_value(x_int))
    out_int_tiled = jax.block_until_ready(add_min_value(x_int, force_tiled=True))
    assert jnp.array_equal(out_int_fused, ref_int)
    assert jnp.array_equal(out_int_tiled, ref_int)

    print("KERNEL_OK")
</pallas_src>

<mosaic_0001>
module attributes {stable_mosaic.version = 11 : i64} {
  func.func @_fused_add_min_kernel(%arg0: memref<4x512xf32, #tpu.memory_space<vmem>>, %arg1: memref<4x512xf32, #tpu.memory_space<vmem>>) attributes {dimension_semantics = [], scalar_prefetch = 0 : i64, scratch_operands = 0 : i64, tpu.core_type = #tpu.core_type<tc>} {
    %c0 = arith.constant 0 : index
    %c0_0 = arith.constant 0 : index
    %0 = vector.load %arg0[%c0, %c0_0] : memref<4x512xf32, #tpu.memory_space<vmem>>, vector<4x512xf32>
    %1 = vector.shape_cast %0 : vector<4x512xf32> to vector<1x4x512xf32>
    %cst = arith.constant dense<0x7F800000> : vector<1xf32>
    %2 = vector.multi_reduction <minimumf>, %1, %cst [1, 2] : vector<1x4x512xf32> to vector<1xf32>
    %3 = vector.shape_cast %2 : vector<1xf32> to vector<1x1x1xf32>
    %4 = vector.extract %3[0, 0, 0] : f32 from vector<1x1x1xf32>
    %5 = vector.broadcast %4 : f32 to vector<4x512xf32>
    %6 = arith.addf %0, %5 : vector<4x512xf32>
    %c0_1 = arith.constant 0 : index
    %c0_2 = arith.constant 0 : index
    %7 = vector.load %arg1[%c0_1, %c0_2] : memref<4x512xf32, #tpu.memory_space<vmem>>, vector<4x512xf32>
    tpu.vector_store %arg1[%c0_1, %c0_2], %6 {strides = array<i32>} : memref<4x512xf32, #tpu.memory_space<vmem>>, vector<4x512xf32>,
    return
  }
}

</mosaic_0001>

<llo_original>
// kernel: tpu_custom_call.1
$region0: #{tpu_custom_call.1}
  #allocation0 [shape = 'u32[]', space=smem, size = 0x4, offset = 0x4, fixed_abs, tag = 'smem constant byte address 0x4 - core index']
  #allocation1 [shape = 'u32[144,128]{1,0:T(1,128)}', space=vmem, size = 0x12000, scoped, tag = 'internal scratch']
  %s0 = inlined_call_operand.hbm [shape: f32[4,512], index: 0, kind: input, shape index: {}]
  %s1 = inlined_call_operand.hbm [shape: f32[4,512], index: 1, kind: output, shape index: {}]
  %s2 = sld [smem:[#allocation0]]
  $region18: #{tpu_custom_call.1} parent=0
    _
  %s4 = ssub.s32 1, %s2
  %s5 = scalar_select 0, %s4, %s2
  $region1: #{tpu_custom_call.1} parent=0
    #allocation2 [shape = 'u8[8192]{0}', space=vmem, size = 0x2000, scoped, tag = 'input window, operand 0, single buffered']
    #allocation3 [shape = 's32[1]{0}', space=sflag, size = 0x4, scoped, tag = 'scoped memory for tpu_custom_call.1']
    #allocation4 [shape = 's32[1]{0}', space=sflag, size = 0x4, scoped, tag = 'scoped memory for tpu_custom_call.1']
    #allocation5 [shape = 'u8[8192]{0}', space=vmem, size = 0x2000, scoped, tag = 'output window, operand 0, single buffered']
    %6 = vsyncpa [#allocation3], 0
    %7 = vsyncpa [#allocation4], 0
    // Predicated region
    $region2: #{tpu_custom_call.1} parent=1 // pred_check
      _
    $region3: #{tpu_custom_call.1} parent=1 // pred_check_branch
      %9 = sbr.rel (0) target = $region5
    $region4: #{tpu_custom_call.1} parent=1 // pred_region
      %s11 = ssub.s32 256, 256
      %12 = vsyncadd [#allocation3], %s11
      %s14 = sshll.u32 [#allocation2], 4
      %s15 = int_to_ptr.vmem [resolvable:$true] %s14
      %17 = dma.hbm_to_vmem [thread:$0]  %s0, 256, %s15, [#allocation3]
    $region5: #{tpu_custom_call.1} parent=1 // pred_fallthru
      _
    // Predicated region
    $region6: #{tpu_custom_call.1} parent=1 // pred_check
      _
    $region7: #{tpu_custom_call.1} parent=1 // pred_check_branch
      %19 = sbr.rel (0) target = $region9
    $region8: #{tpu_custom_call.1} parent=1 // pred_region
      %20 = dma.done [#allocation3], 256
    $region9: #{tpu_custom_call.1} parent=1 // pred_fallthru
      _
    %v21 = vld [vmem:[#allocation2] sm:$0xff]
    %v22 = vld [vmem:[#allocation2 + $0x8] sm:$0xff]
    %v25 = vcombine.high %v21, %v21
    %v26 = vcombine.high %v22, %v22
    %vm29 = vcmask 1043456
    %v30 = vsel %vm29, %v21, inf
    %v31 = vsel %vm29, %v25, inf
    %v32 = vsel %vm29, %v22, inf
    %v33 = vsel %vm29, %v26, inf
    %v34 = vmin.f32 %v30, %v31
    %v35 = vmin.f32 %v32, %v33
    %v36 = vmin.f32 %v34, %v35
    %37 = vmin.xlane.f32.xlu0 %v36
    %v38 = vpop.xlane.xlu0 %37
    %v39 = vrot.slane %v38, 4
    %v40 = vmin.f32 %v38, %v39
    %v41 = vrot.slane %v40, 2
    %v42 = vmin.f32 %v40, %v41
    %v43 = vrot.slane %v42, 1
    %v44 = vmin.f32 %v42, %v43
    %s45 = vtos %v44
    %v46 = vstv %s45
    %v47 = vadd.f32 %v21, %v46
    %v48 = vadd.f32 %v22, %v46
    %49 = vst [vmem:[#allocation5] sm:$0xff] %v47
    %50 = vst [vmem:[#allocation5 + $0x8] sm:$0xff] %v48
    // Predicated region
    $region10: #{tpu_custom_call.1} parent=1 // pred_check
      _
    $region11: #{tpu_custom_call.1} parent=1 // pred_check_branch
      %52 = sbr.rel (0) target = $region13
    $region12: #{tpu_custom_call.1} parent=1 // pred_region
      %s54 = ssub.s32 256, 256
      %55 = vsyncadd [#allocation4], %s54
      %s57 = sshll.u32 [#allocation5], 4
      %s58 = int_to_ptr.vmem [resolvable:$true] %s57
      %60 = dma.vmem_to_hbm [thread:$0]  %s58, 256, %s1, [#allocation4]
    $region13: #{tpu_custom_call.1} parent=1 // pred_fallthru
      _
    // Predicated region
    $region14: #{tpu_custom_call.1} parent=1 // pred_check
      _
    $region15: #{tpu_custom_call.1} parent=1 // pred_check_branch
      %62 = sbr.rel (0) target = $region17
    $region16: #{tpu_custom_call.1} parent=1 // pred_region
      %63 = dma.done [#allocation4], 256
    $region17: #{tpu_custom_call.1} parent=1 // pred_fallthru
      _
    %64 = vsyncpa [#allocation3], 1
    %65 = vsyncpa [#allocation4], 1

</llo_original>
